<compile_context>
chip_gen: v6e
topology: v6e:2x2x1
jax: 0.10.0
libtpu: 0.0.40
codegen_flags: <defaults>
</compile_context>

<pallas_src>
import jax
import jax.numpy as jnp
from jax.experimental import pallas as pl
from jax.experimental.pallas import tpu as pltpu


def mlp_kernel(x_ref, w1_ref, b1_ref, w2_ref, b2_ref, w3_ref, b3_ref, o_ref):
    # x tile: (TB, 784) in native dtype -> bf16 for the MXU.
    x = x_ref[...].astype(jnp.bfloat16)

    h1 = jnp.dot(x, w1_ref[...], preferred_element_type=jnp.float32) + b1_ref[...]
    h1 = jnp.maximum(h1.astype(jnp.bfloat16), 0.0)          # relu in bf16 (identical)

    h2 = jnp.dot(h1, w2_ref[...], preferred_element_type=jnp.float32) + b2_ref[...]
    h2 = jnp.maximum(h2.astype(jnp.bfloat16), 0.0)

    h3 = jnp.dot(h2, w3_ref[...], preferred_element_type=jnp.float32) + b3_ref[...]
    o_ref[...] = jnp.maximum(h3, 0.0)                        # (TB, 10) f32


def _round_up(n, m):
    return ((n + m - 1) // m) * m


def mlp_forward(x, params, *, tb=1024):
    """x: any shape whose trailing elements flatten to 784 (e.g. [B,1,28,28])."""
    w1, b1, w2, b2, w3, b3 = params
    x2d = x.reshape(-1, 784)                 # reshape is a view; no HBM pass
    B = x2d.shape[0]
    n_out = w3.shape[1]                      # 10

    # Weights -> bf16 (tiny, ~0.4 MB total); biases stay f32 for the post-matmul add.
    w1b = w1.astype(jnp.bfloat16)
    w2b = w2.astype(jnp.bfloat16)
    w3b = w3.astype(jnp.bfloat16)
    b1f = b1.astype(jnp.float32)
    b2f = b2.astype(jnp.float32)
    b3f = b3.astype(jnp.float32)

    # Batch tile: aim for >= ~8 grid steps (pipeline overlap + v7x megacore),
    # multiple of 8 sublanes, capped at `tb`. Ragged last block is fine.
    TB = min(tb, _round_up(pl.cdiv(B, 8), 16))
    TB = min(TB, _round_up(B, 8))
    TB = max(TB, 8)
    grid = (pl.cdiv(B, TB),)

    flops = 2 * B * (784 * 256 + 256 * 64 + 64 * n_out)
    bytes_accessed = (
        x2d.size * x2d.dtype.itemsize
        + (w1b.size + w2b.size + w3b.size) * 2
        + (b1f.size + b2f.size + b3f.size) * 4
        + B * n_out * 4
    )

    out = pl.pallas_call(
        mlp_kernel,
        out_shape=jax.ShapeDtypeStruct((B, n_out), jnp.float32),
        grid=grid,
        in_specs=[
            pl.BlockSpec((TB, 784), lambda i: (i, 0)),     # x tile (streamed, f32)
            pl.BlockSpec((784, 256), lambda i: (0, 0)),    # W1 (VMEM-resident)
            pl.BlockSpec((1, 256), lambda i: (0, 0)),      # b1
            pl.BlockSpec((256, 64), lambda i: (0, 0)),     # W2
            pl.BlockSpec((1, 64), lambda i: (0, 0)),       # b2
            pl.BlockSpec((64, n_out), lambda i: (0, 0)),   # W3
            pl.BlockSpec((1, n_out), lambda i: (0, 0)),    # b3
        ],
        out_specs=pl.BlockSpec((TB, n_out), lambda i: (i, 0)),
        compiler_params=pltpu.CompilerParams(
            dimension_semantics=("parallel",),
            vmem_limit_bytes=32 * 1024 * 1024,
        ),
        cost_estimate=pl.CostEstimate(
            flops=flops, transcendentals=0, bytes_accessed=bytes_accessed
        ),
    )(x2d, w1b, b1f, w2b, b2f, w3b, b3f)

    return out


def init_params(key):
    """Deterministic init matching nn.Linear shapes (stored as [in, out] / [1, out])."""
    ks = jax.random.split(key, 6)

    def linear(kw, kb, fan_in, fan_out):
        bound = 1.0 / jnp.sqrt(fan_in)
        w = jax.random.uniform(kw, (fan_in, fan_out), jnp.float32, -bound, bound)
        b = jax.random.uniform(kb, (1, fan_out), jnp.float32, -bound, bound)
        return w, b

    w1, b1 = linear(ks[0], ks[1], 784, 256)
    w2, b2 = linear(ks[2], ks[3], 256, 64)
    w3, b3 = linear(ks[4], ks[5], 64, 10)
    return (w1, b1, w2, b2, w3, b3)


def mlp_ref(x, params):
    """Reference with the same bf16-matmul / f32-accumulate numerics as the kernel."""
    w1, b1, w2, b2, w3, b3 = params
    h = x.reshape(-1, 784).astype(jnp.bfloat16)
    h = jnp.maximum(
        (jnp.dot(h, w1.astype(jnp.bfloat16), preferred_element_type=jnp.float32) + b1
         ).astype(jnp.bfloat16), 0.0)
    h = jnp.maximum(
        (jnp.dot(h, w2.astype(jnp.bfloat16), preferred_element_type=jnp.float32) + b2
         ).astype(jnp.bfloat16), 0.0)
    h = jnp.maximum(
        jnp.dot(h, w3.astype(jnp.bfloat16), preferred_element_type=jnp.float32) + b3, 0.0)
    return h.astype(jnp.float32)


if __name__ == "__main__":
    key = jax.random.PRNGKey(0)
    k_x, k_x2, k_p = jax.random.split(key, 3)
    params = init_params(k_p)

    # Small MNIST-like batch: [B, 1, 28, 28] -> view(-1, 784)
    x = jax.random.normal(k_x, (8, 1, 28, 28), jnp.float32)
    out = jax.block_until_ready(mlp_forward(x, params))
    ref = mlp_ref(x, params)
    assert out.shape == (8, 10), out.shape
    assert jnp.allclose(out, ref, atol=2e-2, rtol=2e-2), (
        "mismatch vs reference; max abs diff "
        + str(float(jnp.max(jnp.abs(out - ref))))
    )

    # Ragged, multi-step grid path (B not a multiple of TB).
    x2 = jax.random.normal(k_x2, (37, 784), jnp.float32)
    out2 = jax.block_until_ready(mlp_forward(x2, params))
    ref2 = mlp_ref(x2, params)
    assert out2.shape == (37, 10), out2.shape
    assert jnp.allclose(out2, ref2, atol=2e-2, rtol=2e-2), (
        "ragged-batch mismatch vs reference; max abs diff "
        + str(float(jnp.max(jnp.abs(out2 - ref2))))
    )

    print("KERNEL_OK")
</pallas_src>

<mosaic_0001>
module attributes {stable_mosaic.version = 11 : i64} {
  func.func @mlp_kernel(%arg0: i32, %arg1: memref<8x784xf32, #tpu.memory_space<vmem>>, %arg2: memref<784x256xbf16, #tpu.memory_space<vmem>>, %arg3: memref<1x256xf32, #tpu.memory_space<vmem>>, %arg4: memref<256x64xbf16, #tpu.memory_space<vmem>>, %arg5: memref<1x64xf32, #tpu.memory_space<vmem>>, %arg6: memref<64x10xbf16, #tpu.memory_space<vmem>>, %arg7: memref<1x10xf32, #tpu.memory_space<vmem>>, %arg8: memref<8x10xf32, #tpu.memory_space<vmem>>) attributes {dimension_semantics = [#tpu.dimension_semantics<parallel>], iteration_bounds = array<i64: 1>, scalar_prefetch = 0 : i64, scratch_operands = 0 : i64, tpu.core_type = #tpu.core_type<tc>, window_params = [{transform_indices = @transform_0, window_bounds = array<i64: 8, 784>}, {pipeline_mode = #tpu.pipeline_mode<synchronous>, transform_indices = @transform_1, window_bounds = array<i64: 784, 256>}, {pipeline_mode = #tpu.pipeline_mode<synchronous>, transform_indices = @transform_2, window_bounds = array<i64: 1, 256>}, {pipeline_mode = #tpu.pipeline_mode<synchronous>, transform_indices = @transform_3, window_bounds = array<i64: 256, 64>}, {pipeline_mode = #tpu.pipeline_mode<synchronous>, transform_indices = @transform_4, window_bounds = array<i64: 1, 64>}, {pipeline_mode = #tpu.pipeline_mode<synchronous>, transform_indices = @transform_5, window_bounds = array<i64: 64, 10>}, {pipeline_mode = #tpu.pipeline_mode<synchronous>, transform_indices = @transform_6, window_bounds = array<i64: 1, 10>}, {transform_indices = @transform_7, window_bounds = array<i64: 8, 10>}]} {
    %c0 = arith.constant 0 : index
    %c0_0 = arith.constant 0 : index
    %0 = vector.load %arg1[%c0, %c0_0] : memref<8x784xf32, #tpu.memory_space<vmem>>, vector<8x784xf32>
    %1 = arith.truncf %0 : vector<8x784xf32> to vector<8x784xbf16>
    %c0_1 = arith.constant 0 : index
    %c0_2 = arith.constant 0 : index
    %2 = vector.load %arg2[%c0_1, %c0_2] : memref<784x256xbf16, #tpu.memory_space<vmem>>, vector<784x256xbf16>
    %cst = arith.constant dense<0.000000e+00> : vector<8x256xf32>
    %3 = tpu.matmul %1, %2, %cst {dimension_numbers = #tpu.dot_dimension_numbers<[1], [0], [0], [1], [0, 0, 1, 1], [], []>} : vector<8x784xbf16>, vector<784x256xbf16>, vector<8x256xf32> -> vector<8x256xf32>
    %c0_3 = arith.constant 0 : index
    %c0_4 = arith.constant 0 : index
    %4 = vector.load %arg3[%c0_3, %c0_4] : memref<1x256xf32, #tpu.memory_space<vmem>>, vector<1x256xf32>
    %5 = vector.broadcast %4 : vector<1x256xf32> to vector<8x256xf32>
    %6 = arith.addf %3, %5 : vector<8x256xf32>
    %7 = arith.truncf %6 : vector<8x256xf32> to vector<8x256xbf16>
    %cst_5 = arith.constant 0.000000e+00 : bf16
    %8 = vector.broadcast %cst_5 : bf16 to vector<8x256xbf16>
    %9 = arith.maximumf %7, %8 : vector<8x256xbf16>
    %c0_6 = arith.constant 0 : index
    %c0_7 = arith.constant 0 : index
    %10 = vector.load %arg4[%c0_6, %c0_7] : memref<256x64xbf16, #tpu.memory_space<vmem>>, vector<256x64xbf16>
    %cst_8 = arith.constant dense<0.000000e+00> : vector<8x64xf32>
    %11 = tpu.matmul %9, %10, %cst_8 {dimension_numbers = #tpu.dot_dimension_numbers<[1], [0], [0], [1], [0, 0, 1, 1], [], []>} : vector<8x256xbf16>, vector<256x64xbf16>, vector<8x64xf32> -> vector<8x64xf32>
    %c0_9 = arith.constant 0 : index
    %c0_10 = arith.constant 0 : index
    %12 = vector.load %arg5[%c0_9, %c0_10] : memref<1x64xf32, #tpu.memory_space<vmem>>, vector<1x64xf32>
    %13 = vector.broadcast %12 : vector<1x64xf32> to vector<8x64xf32>
    %14 = arith.addf %11, %13 : vector<8x64xf32>
    %15 = arith.truncf %14 : vector<8x64xf32> to vector<8x64xbf16>
    %cst_11 = arith.constant 0.000000e+00 : bf16
    %16 = vector.broadcast %cst_11 : bf16 to vector<8x64xbf16>
    %17 = arith.maximumf %15, %16 : vector<8x64xbf16>
    %c0_12 = arith.constant 0 : index
    %c0_13 = arith.constant 0 : index
    %18 = vector.load %arg6[%c0_12, %c0_13] : memref<64x10xbf16, #tpu.memory_space<vmem>>, vector<64x10xbf16>
    %cst_14 = arith.constant dense<0.000000e+00> : vector<8x10xf32>
    %19 = tpu.matmul %17, %18, %cst_14 {dimension_numbers = #tpu.dot_dimension_numbers<[1], [0], [0], [1], [0, 0, 1, 1], [], []>} : vector<8x64xbf16>, vector<64x10xbf16>, vector<8x10xf32> -> vector<8x10xf32>
    %c0_15 = arith.constant 0 : index
    %c0_16 = arith.constant 0 : index
    %20 = vector.load %arg7[%c0_15, %c0_16] : memref<1x10xf32, #tpu.memory_space<vmem>>, vector<1x10xf32>
    %21 = vector.broadcast %20 : vector<1x10xf32> to vector<8x10xf32>
    %22 = arith.addf %19, %21 : vector<8x10xf32>
    %cst_17 = arith.constant 0.000000e+00 : f32
    %23 = vector.broadcast %cst_17 : f32 to vector<8x10xf32>
    %24 = arith.maximumf %22, %23 : vector<8x10xf32>
    %c0_18 = arith.constant 0 : index
    %c0_19 = arith.constant 0 : index
    %25 = vector.load %arg8[%c0_18, %c0_19] : memref<8x10xf32, #tpu.memory_space<vmem>>, vector<8x10xf32>
    tpu.vector_store %arg8[%c0_18, %c0_19], %24 {strides = array<i32>} : memref<8x10xf32, #tpu.memory_space<vmem>>, vector<8x10xf32>,
    return
  }
  func.func @transform_0(%arg0: i32) -> (i32, i32) {
    %c0_i32 = arith.constant 0 : i32
    %c0_i32_0 = arith.constant 0 : i32
    return %arg0, %c0_i32 : i32, i32
  }
  func.func @transform_1(%arg0: i32) -> (i32, i32) {
    %c0_i32 = arith.constant 0 : i32
    %c0_i32_0 = arith.constant 0 : i32
    %c0_i32_1 = arith.constant 0 : i32
    return %c0_i32, %c0_i32_0 : i32, i32
  }
  func.func @transform_2(%arg0: i32) -> (i32, i32) {
    %c0_i32 = arith.constant 0 : i32
    %c0_i32_0 = arith.constant 0 : i32
    %c0_i32_1 = arith.constant 0 : i32
    return %c0_i32, %c0_i32_0 : i32, i32
  }
  func.func @transform_3(%arg0: i32) -> (i32, i32) {
    %c0_i32 = arith.constant 0 : i32
    %c0_i32_0 = arith.constant 0 : i32
    %c0_i32_1 = arith.constant 0 : i32
    return %c0_i32, %c0_i32_0 : i32, i32
  }
  func.func @transform_4(%arg0: i32) -> (i32, i32) {
    %c0_i32 = arith.constant 0 : i32
    %c0_i32_0 = arith.constant 0 : i32
    %c0_i32_1 = arith.constant 0 : i32
    return %c0_i32, %c0_i32_0 : i32, i32
  }
  func.func @transform_5(%arg0: i32) -> (i32, i32) {
    %c0_i32 = arith.constant 0 : i32
    %c0_i32_0 = arith.constant 0 : i32
    %c0_i32_1 = arith.constant 0 : i32
    return %c0_i32, %c0_i32_0 : i32, i32
  }
  func.func @transform_6(%arg0: i32) -> (i32, i32) {
    %c0_i32 = arith.constant 0 : i32
    %c0_i32_0 = arith.constant 0 : i32
    %c0_i32_1 = arith.constant 0 : i32
    return %c0_i32, %c0_i32_0 : i32, i32
  }
  func.func @transform_7(%arg0: i32) -> (i32, i32) {
    %c0_i32 = arith.constant 0 : i32
    %c0_i32_0 = arith.constant 0 : i32
    return %arg0, %c0_i32 : i32, i32
  }
}

</mosaic_0001>

<llo_original>
// kernel: tpu_custom_call.1
$region0: #{tpu_custom_call.1}
  #allocation0 [shape = 'u32[]', space=smem, size = 0x4, offset = 0x4, fixed_abs, tag = 'smem constant byte address 0x4 - core index']
  #allocation1 [shape = 'u32[144,128]{1,0:T(1,128)}', space=vmem, size = 0x12000, scoped, tag = 'internal scratch']
  %s0 = inlined_call_operand.vmem [shape: f32[8,784], index: 0, kind: input, shape index: {}]
  %s1 = inlined_call_operand.hbm [shape: bf16[784,256], index: 1, kind: input, shape index: {}]
  %s2 = inlined_call_operand.vmem [shape: f32[1,256], index: 2, kind: input, shape index: {}]
  %s3 = inlined_call_operand.vmem [shape: bf16[256,64], index: 3, kind: input, shape index: {}]
  %s4 = inlined_call_operand.vmem [shape: f32[1,64], index: 4, kind: input, shape index: {}]
  %s5 = inlined_call_operand.vmem [shape: bf16[64,10], index: 5, kind: input, shape index: {}]
  %s6 = inlined_call_operand.vmem [shape: f32[1,10], index: 6, kind: input, shape index: {}]
  %s7 = inlined_call_operand.hbm [shape: f32[8,10], index: 7, kind: output, shape index: {}]
  %s8 = sld [smem:[#allocation0]]
  $region42: #{tpu_custom_call.1} parent=0
    _
  %s10 = ssub.s32 1, %s8
  %s11 = scalar_select 0, %s10, %s8
  $region1: #{tpu_custom_call.1} parent=0
    #allocation2 [shape = 'u8[401408]{0}', space=vmem, size = 0x62000, scoped, tag = 'input window, operand 1, single buffered']
    #allocation3 [shape = 's32[1]{0}', space=sflag, size = 0x4, scoped, tag = 'scoped memory for tpu_custom_call.1']
    #allocation4 [shape = 's32[1]{0}', space=sflag, size = 0x4, scoped, tag = 'scoped memory for tpu_custom_call.1']
    #allocation5 [shape = 'u8[4096]{0}', space=vmem, size = 0x1000, scoped, tag = 'output window, operand 0, single buffered']
    %12 = vsyncpa [#allocation3], 0
    %13 = vsyncpa [#allocation4], 0
    // Predicated region
    $region2: #{tpu_custom_call.1} parent=1 // pred_check
      _
    $region3: #{tpu_custom_call.1} parent=1 // pred_check_branch
      %15 = sbr.rel (0) target = $region5
    $region4: #{tpu_custom_call.1} parent=1 // pred_region
      _
    $region5: #{tpu_custom_call.1} parent=1 // pred_fallthru
      _
    // Predicated region
    $region6: #{tpu_custom_call.1} parent=1 // pred_check
      _
    $region7: #{tpu_custom_call.1} parent=1 // pred_check_branch
      %17 = sbr.rel (0) target = $region9
    $region8: #{tpu_custom_call.1} parent=1 // pred_region
      %s19 = ssub.s32 12544, 12544
      %20 = vsyncadd [#allocation3], %s19
      %s21 = sshll.u32 [#allocation2], 4
      %s22 = int_to_ptr.vmem [resolvable:$true] %s21
      %27 = dma.hbm_to_vmem [thread:$0]  %s1, 12544, %s22, [#allocation3], 128, 128, 8
    $region9: #{tpu_custom_call.1} parent=1 // pred_fallthru
      _
    // Predicated region
    $region10: #{tpu_custom_call.1} parent=1 // pred_check
      _
    $region11: #{tpu_custom_call.1} parent=1 // pred_check_branch
      %29 = sbr.rel (0) target = $region13
    $region12: #{tpu_custom_call.1} parent=1 // pred_region
      _
    $region13: #{tpu_custom_call.1} parent=1 // pred_fallthru
      _
    // Predicated region
    $region14: #{tpu_custom_call.1} parent=1 // pred_check
      _
    $region15: #{tpu_custom_call.1} parent=1 // pred_check_branch
      %31 = sbr.rel (0) target = $region17
    $region16: #{tpu_custom_call.1} parent=1 // pred_region
      _
    $region17: #{tpu_custom_call.1} parent=1 // pred_fallthru
      _
    // Predicated region
    $region18: #{tpu_custom_call.1} parent=1 // pred_check
      _
    $region19: #{tpu_custom_call.1} parent=1 // pred_check_branch
      %33 = sbr.rel (0) target = $region21
    $region20: #{tpu_custom_call.1} parent=1 // pred_region
      _
    $region21: #{tpu_custom_call.1} parent=1 // pred_fallthru
      _
    // Predicated region
    $region22: #{tpu_custom_call.1} parent=1 // pred_check
      _
    $region23: #{tpu_custom_call.1} parent=1 // pred_check_branch
      %35 = sbr.rel (0) target = $region25
    $region24: #{tpu_custom_call.1} parent=1 // pred_region
      _
    $region25: #{tpu_custom_call.1} parent=1 // pred_fallthru
      _
    // Predicated region
    $region26: #{tpu_custom_call.1} parent=1 // pred_check
      _
    $region27: #{tpu_custom_call.1} parent=1 // pred_check_branch
      %37 = sbr.rel (0) target = $region29
    $region28: #{tpu_custom_call.1} parent=1 // pred_region
      _
    $region29: #{tpu_custom_call.1} parent=1 // pred_fallthru
      _
    // Predicated region
    $region30: #{tpu_custom_call.1} parent=1 // pred_check
      _
    $region31: #{tpu_custom_call.1} parent=1 // pred_check_branch
      %39 = sbr.rel (0) target = $region33
    $region32: #{tpu_custom_call.1} parent=1 // pred_region
      %40 = dma.done [#allocation3], 12544
    $region33: #{tpu_custom_call.1} parent=1 // pred_fallthru
      _
    %v42 = vld [vmem:[%s0] sm:$0xff]
    %v43 = vld [vmem:[%s0 + $0x8] sm:$0xff]
    %v44 = vld [vmem:[%s0 + $0x10] sm:$0xff]
    %v45 = vld [vmem:[%s0 + $0x18] sm:$0xff]
    %v46 = vld [vmem:[%s0 + $0x20] sm:$0xff]
    %v47 = vld [vmem:[%s0 + $0x28] sm:$0xff]
    %v48 = vld [vmem:[%s0 + $0x30] sm:$0xff]
    %v49 = vpack.c.bf16 %v42, %v42
    %v50 = vpack.c.bf16 %v43, %v43
    %v51 = vpack.c.bf16 %v44, %v44
    %v52 = vpack.c.bf16 %v45, %v45
    %v53 = vpack.c.bf16 %v46, %v46
    %v54 = vpack.c.bf16 %v47, %v47
    %v55 = vpack.c.bf16 %v48, %v48
    %v56 = vld [vmem:[#allocation2] sm:$0xff]
    %v57 = vld [vmem:[#allocation2 + $0x8] sm:$0xff]
    %v58 = vld [vmem:[#allocation2 + $0x10] sm:$0xff]
    %v59 = vld [vmem:[#allocation2 + $0x18] sm:$0xff]
    %v60 = vld [vmem:[#allocation2 + $0x20] sm:$0xff]
    %v61 = vld [vmem:[#allocation2 + $0x28] sm:$0xff]
    %v62 = vld [vmem:[#allocation2 + $0x30] sm:$0xff]
    %v63 = vld [vmem:[#allocation2 + $0x38] sm:$0xff]
    %v64 = vld [vmem:[#allocation2 + $0x40] sm:$0xff]
    %v65 = vld [vmem:[#allocation2 + $0x48] sm:$0xff]
    %v66 = vld [vmem:[#allocation2 + $0x50] sm:$0xff]
    %v67 = vld [vmem:[#allocation2 + $0x58] sm:$0xff]
    %v68 = vld [vmem:[#allocation2 + $0x60] sm:$0xff]
    %v69 = vld [vmem:[#allocation2 + $0x68] sm:$0xff]
    %v70 = vld [vmem:[#allocation2 + $0x70] sm:$0xff]
    %v71 = vld [vmem:[#allocation2 + $0x78] sm:$0xff]
    %v72 = vld [vmem:[#allocation2 + $0x80] sm:$0xff]
    %v73 = vld [vmem:[#allocation2 + $0x88] sm:$0xff]
    %v74 = vld [vmem:[#allocation2 + $0x90] sm:$0xff]
    %v75 = vld [vmem:[#allocation2 + $0x98] sm:$0xff]
    %v76 = vld [vmem:[#allocation2 + $0xa0] sm:$0xff]
    %v77 = vld [vmem:[#allocation2 + $0xa8] sm:$0xff]
    %v78 = vld [vmem:[#allocation2 + $0xb0] sm:$0xff]
    %v79 = vld [vmem:[#allocation2 + $0xb8] sm:$0xff]
    %v80 = vld [vmem:[#allocation2 + $0xc0] sm:$0xff]
    %v81 = vld [vmem:[#allocation2 + $0xc8] sm:$0xff]
    %v82 = vld [vmem:[#allocation2 + $0xd0] sm:$0xff]
    %v83 = vld [vmem:[#allocation2 + $0xd8] sm:$0xff]
    %v84 = vld [vmem:[#allocation2 + $0xe0] sm:$0xff]
    %v85 = vld [vmem:[#allocation2 + $0xe8] sm:$0xff]
    %v86 = vld [vmem:[#allocation2 + $0xf0] sm:$0xff]
    %v87 = vld [vmem:[#allocation2 + $0xf8] sm:$0xff]
    %v88 = vld [vmem:[#allocation2 + $0x100] sm:$0xff]
    %v89 = vld [vmem:[#allocation2 + $0x108] sm:$0xff]
    %v90 = vld [vmem:[#allocation2 + $0x110] sm:$0xff]
    %v91 = vld [vmem:[#allocation2 + $0x118] sm:$0xff]
    %v92 = vld [vmem:[#allocation2 + $0x120] sm:$0xff]
    %v93 = vld [vmem:[#allocation2 + $0x128] sm:$0xff]
    %v94 = vld [vmem:[#allocation2 + $0x130] sm:$0xff]
    %v95 = vld [vmem:[#allocation2 + $0x138] sm:$0xff]
    %v96 = vld [vmem:[#allocation2 + $0x140] sm:$0xff]
    %v97 = vld [vmem:[#allocation2 + $0x148] sm:$0xff]
    %v98 = vld [vmem:[#allocation2 + $0x150] sm:$0xff]
    %v99 = vld [vmem:[#allocation2 + $0x158] sm:$0xff]
    %v100 = vld [vmem:[#allocation2 + $0x160] sm:$0xff]
    %v101 = vld [vmem:[#allocation2 + $0x168] sm:$0xff]
    %v102 = vld [vmem:[#allocation2 + $0x170] sm:$0xff]
    %v103 = vld [vmem:[#allocation2 + $0x178] sm:$0xff]
    %v104 = vld [vmem:[#allocation2 + $0x180] sm:$0xff]
    %v105 = vld [vmem:[#allocation2 + $0x188] sm:$0xff]
    %v106 = vld [vmem:[#allocation2 + $0x190] sm:$0xff]
    %v107 = vld [vmem:[#allocation2 + $0x198] sm:$0xff]
    %v108 = vld [vmem:[#allocation2 + $0x1a0] sm:$0xff]
    %v109 = vld [vmem:[#allocation2 + $0x1a8] sm:$0xff]
    %v110 = vld [vmem:[#allocation2 + $0x1b0] sm:$0xff]
    %v111 = vld [vmem:[#allocation2 + $0x1b8] sm:$0xff]
    %v112 = vld [vmem:[#allocation2 + $0x1c0] sm:$0xff]
    %v113 = vld [vmem:[#allocation2 + $0x1c8] sm:$0xff]
    %v114 = vld [vmem:[#allocation2 + $0x1d0] sm:$0xff]
    %v115 = vld [vmem:[#allocation2 + $0x1d8] sm:$0xff]
    %v116 = vld [vmem:[#allocation2 + $0x1e0] sm:$0xff]
    %v117 = vld [vmem:[#allocation2 + $0x1e8] sm:$0xff]
    %v118 = vld [vmem:[#allocation2 + $0x1f0] sm:$0xff]
    %v119 = vld [vmem:[#allocation2 + $0x1f8] sm:$0xff]
    %v120 = vld [vmem:[#allocation2 + $0x200] sm:$0xff]
    %v121 = vld [vmem:[#allocation2 + $0x208] sm:$0xff]
    %v122 = vld [vmem:[#allocation2 + $0x210] sm:$0xff]
    %v123 = vld [vmem:[#allocation2 + $0x218] sm:$0xff]
    %v124 = vld [vmem:[#allocation2 + $0x220] sm:$0xff]
    %v125 = vld [vmem:[#allocation2 + $0x228] sm:$0xff]
    %v126 = vld [vmem:[#allocation2 + $0x230] sm:$0xff]
    %v127 = vld [vmem:[#allocation2 + $0x238] sm:$0xff]
    %v128 = vld [vmem:[#allocation2 + $0x240] sm:$0xff]
    %v129 = vld [vmem:[#allocation2 + $0x248] sm:$0xff]
    %v130 = vld [vmem:[#allocation2 + $0x250] sm:$0xff]
    %v131 = vld [vmem:[#allocation2 + $0x258] sm:$0xff]
    %v132 = vld [vmem:[#allocation2 + $0x260] sm:$0xff]
    %v133 = vld [vmem:[#allocation2 + $0x268] sm:$0xff]
    %v134 = vld [vmem:[#allocation2 + $0x270] sm:$0xff]
    %v135 = vld [vmem:[#allocation2 + $0x278] sm:$0xff]
    %v136 = vld [vmem:[#allocation2 + $0x280] sm:$0xff]
    %v137 = vld [vmem:[#allocation2 + $0x288] sm:$0xff]
    %v138 = vld [vmem:[#allocation2 + $0x290] sm:$0xff]
    %v139 = vld [vmem:[#allocation2 + $0x298] sm:$0xff]
    %v140 = vld [vmem:[#allocation2 + $0x2a0] sm:$0xff]
    %v141 = vld [vmem:[#allocation2 + $0x2a8] sm:$0xff]
    %v142 = vld [vmem:[#allocation2 + $0x2b0] sm:$0xff]
    %v143 = vld [vmem:[#allocation2 + $0x2b8] sm:$0xff]
    %v144 = vld [vmem:[#allocation2 + $0x2c0] sm:$0xff]
    %v145 = vld [vmem:[#allocation2 + $0x2c8] sm:$0xff]
    %v146 = vld [vmem:[#allocation2 + $0x2d0] sm:$0xff]
    %v147 = vld [vmem:[#allocation2 + $0x2d8] sm:$0xff]
    %v148 = vld [vmem:[#allocation2 + $0x2e0] sm:$0xff]
    %v149 = vld [vmem:[#allocation2 + $0x2e8] sm:$0xff]
    %v150 = vld [vmem:[#allocation2 + $0x2f0] sm:$0xff]
    %v151 = vld [vmem:[#allocation2 + $0x2f8] sm:$0xff]
    %v152 = vld [vmem:[#allocation2 + $0x300] sm:$0xff]
    %v153 = vld [vmem:[#allocation2 + $0x308] sm:$0xff]
    %v154 = vld [vmem:[%s2] sm:$0x3]
    %v156 = vlaneseq
    %v157 = vshrl.u32 %v156, 7
    %v158 = vsub.s32 0, %v157
    %v159 = vrot.slane %v154, %v158
    %v160 = vlaneseq
    %v161 = vshrl.u32 %v160, 7
    %v162 = vsub.s32 1, %v161
    %v163 = vrot.slane %v154, %v162
    %v264 = vunpack.c.l.b16 %v56
    %v265 = vunpack.c.h.b16 %v56
    %v266 = vunpack.c.l.b16 %v57
    %v267 = vunpack.c.h.b16 %v57
    %v268 = vunpack.c.l.b16 %v58
    %v269 = vunpack.c.h.b16 %v58
    %v270 = vunpack.c.l.b16 %v59
    %v271 = vunpack.c.h.b16 %v59
    %v272 = vunpack.c.l.b16 %v60
    %v273 = vunpack.c.h.b16 %v60
    %v274 = vunpack.c.l.b16 %v61
    %v275 = vunpack.c.h.b16 %v61
    %v276 = vunpack.c.l.b16 %v62
    %v277 = vunpack.c.h.b16 %v62
    %v278 = vunpack.c.l.b16 %v63
    %v279 = vunpack.c.h.b16 %v63
    %v280 = vunpack.c.l.b16 %v64
    %v281 = vunpack.c.h.b16 %v64
    %v282 = vunpack.c.l.b16 %v65
    %v283 = vunpack.c.h.b16 %v65
    %v284 = vunpack.c.l.b16 %v66
    %v285 = vunpack.c.h.b16 %v66
    %v286 = vunpack.c.l.b16 %v67
    %v287 = vunpack.c.h.b16 %v67
    %v288 = vunpack.c.l.b16 %v68
    %v289 = vunpack.c.h.b16 %v68
    %v290 = vunpack.c.l.b16 %v69
    %v291 = vunpack.c.h.b16 %v69
    %v292 = vunpack.c.l.b16 %v70
    %v293 = vunpack.c.h.b16 %v70
    %v294 = vunpack.c.l.b16 %v71
    %v295 = vunpack.c.h.b16 %v71
    %v296 = vunpack.c.l.b16 %v72
    %v297 = vunpack.c.h.b16 %v72
    %v298 = vunpack.c.l.b16 %v73
    %v299 = vunpack.c.h.b16 %v73
    %v300 = vunpack.c.l.b16 %v74
    %v301 = vunpack.c.h.b16 %v74
    %v302 = vunpack.c.l.b16 %v75
    %v303 = vunpack.c.h.b16 %v75
    %v304 = vunpack.c.l.b16 %v76
    %v305 = vunpack.c.h.b16 %v76
    %v306 = vunpack.c.l.b16 %v77
    %v307 = vunpack.c.h.b16 %v77
    %v308 = vunpack.c.l.b16 %v78
    %v309 = vunpack.c.h.b16 %v78
    %v310 = vunpack.c.l.b16 %v79
    %v311 = vunpack.c.h.b16 %v79
    %v312 = vunpack.c.l.b16 %v80
    %v313 = vunpack.c.h.b16 %v80
    %v314 = vunpack.c.l.b16 %v81
    %v315 = vunpack.c.h.b16 %v81
    %v316 = vunpack.c.l.b16 %v82
    %v317 = vunpack.c.h.b16 %v82
    %v318 = vunpack.c.l.b16 %v83
    %v319 = vunpack.c.h.b16 %v83
    %v320 = vunpack.c.l.b16 %v84
    %v321 = vunpack.c.h.b16 %v84
    %v322 = vunpack.c.l.b16 %v85
    %v323 = vunpack.c.h.b16 %v85
    %v324 = vunpack.c.l.b16 %v86
    %v325 = vunpack.c.h.b16 %v86
    %v326 = vunpack.c.l.b16 %v87
    %v327 = vunpack.c.h.b16 %v87
    %v328 = vunpack.c.l.b16 %v88
    %v329 = vunpack.c.h.b16 %v88
    %v330 = vunpack.c.l.b16 %v89
    %v331 = vunpack.c.h.b16 %v89
    %v332 = vunpack.c.l.b16 %v90
    %v333 = vunpack.c.h.b16 %v90
    %v334 = vunpack.c.l.b16 %v91
    %v335 = vunpack.c.h.b16 %v91
    %v336 = vunpack.c.l.b16 %v92
    %v337 = vunpack.c.h.b16 %v92
    %v338 = vunpack.c.l.b16 %v93
    %v339 = vunpack.c.h.b16 %v93
    %v340 = vunpack.c.l.b16 %v94
    %v341 = vunpack.c.h.b16 %v94
    %v342 = vunpack.c.l.b16 %v95
    %v343 = vunpack.c.h.b16 %v95
    %v344 = vunpack.c.l.b16 %v96
    %v345 = vunpack.c.h.b16 %v96
    %v346 = vunpack.c.l.b16 %v97
    %v347 = vunpack.c.h.b16 %v97
    %v348 = vunpack.c.l.b16 %v98
    %v349 = vunpack.c.h.b16 %v98
    %v350 = vunpack.c.l.b16 %v99
    %v351 = vunpack.c.h.b16 %v99
    %v352 = vunpack.c.l.b16 %v100
    %v353 = vunpack.c.h.b16 %v100
    %v354 = vunpack.c.l.b16 %v101
    %v355 = vunpack.c.h.b16 %v101
    %v356 = vunpack.c.l.b16 %v102
    %v357 = vunpack.c.h.b16 %v102
    %v358 = vunpack.c.l.b16 %v103
    %v359 = vunpack.c.h.b16 %v103
    %v360 = vunpack.c.l.b16 %v104
    %v361 = vunpack.c.h.b16 %v104
    %v362 = vunpack.c.l.b16 %v105
    %v363 = vunpack.c.h.b16 %v105
    %v364 = vunpack.c.l.b16 %v106
    %v365 = vunpack.c.h.b16 %v106
    %v366 = vunpack.c.l.b16 %v107
    %v367 = vunpack.c.h.b16 %v107
    %v368 = vunpack.c.l.b16 %v108
    %v369 = vunpack.c.h.b16 %v108
    %v370 = vunpack.c.l.b16 %v109
    %v371 = vunpack.c.h.b16 %v109
    %v372 = vunpack.c.l.b16 %v110
    %v373 = vunpack.c.h.b16 %v110
    %v374 = vunpack.c.l.b16 %v111
    %v375 = vunpack.c.h.b16 %v111
    %v376 = vunpack.c.l.b16 %v112
    %v377 = vunpack.c.h.b16 %v112
    %v378 = vunpack.c.l.b16 %v113
    %v379 = vunpack.c.h.b16 %v113
    %v380 = vunpack.c.l.b16 %v114
    %v381 = vunpack.c.h.b16 %v114
    %v382 = vunpack.c.l.b16 %v115
    %v383 = vunpack.c.h.b16 %v115
    %v384 = vunpack.c.l.b16 %v116
    %v385 = vunpack.c.h.b16 %v116
    %v386 = vunpack.c.l.b16 %v117
    %v387 = vunpack.c.h.b16 %v117
    %v388 = vunpack.c.l.b16 %v118
    %v389 = vunpack.c.h.b16 %v118
    %v390 = vunpack.c.l.b16 %v119
    %v391 = vunpack.c.h.b16 %v119
    %v392 = vunpack.c.l.b16 %v120
    %v393 = vunpack.c.h.b16 %v120
    %v394 = vunpack.c.l.b16 %v121
    %v395 = vunpack.c.h.b16 %v121
    %v396 = vunpack.c.l.b16 %v122
    %v397 = vunpack.c.h.b16 %v122
    %v398 = vunpack.c.l.b16 %v123
    %v399 = vunpack.c.h.b16 %v123
    %v400 = vunpack.c.l.b16 %v124
    %v401 = vunpack.c.h.b16 %v124
    %v402 = vunpack.c.l.b16 %v125
    %v403 = vunpack.c.h.b16 %v125
    %v404 = vunpack.c.l.b16 %v126
    %v405 = vunpack.c.h.b16 %v126
    %v406 = vunpack.c.l.b16 %v127
    %v407 = vunpack.c.h.b16 %v127
    %v408 = vunpack.c.l.b16 %v128
    %v409 = vunpack.c.h.b16 %v128
    %v410 = vunpack.c.l.b16 %v129
    %v411 = vunpack.c.h.b16 %v129
    %v412 = vunpack.c.l.b16 %v130
    %v413 = vunpack.c.h.b16 %v130
    %v414 = vunpack.c.l.b16 %v131
    %v415 = vunpack.c.h.b16 %v131
    %v416 = vunpack.c.l.b16 %v132
    %v417 = vunpack.c.h.b16 %v132
    %v418 = vunpack.c.l.b16 %v133
    %v419 = vunpack.c.h.b16 %v133
    %v420 = vunpack.c.l.b16 %v134
    %v421 = vunpack.c.h.b16 %v134
    %v422 = vunpack.c.l.b16 %v135
    %v423 = vunpack.c.h.b16 %v135
    %v424 = vunpack.c.l.b16 %v136
    %v425 = vunpack.c.h.b16 %v136
    %v426 = vunpack.c.l.b16 %v137
    %v427 = vunpack.c.h.b16 %v137
    %v428 = vunpack.c.l.b16 %v138
    %v429 = vunpack.c.h.b16 %v138
    %v430 = vunpack.c.l.b16 %v139
    %v431 = vunpack.c.h.b16 %v139
    %v432 = vunpack.c.l.b16 %v140
    %v433 = vunpack.c.h.b16 %v140
    %v434 = vunpack.c.l.b16 %v141
    %v435 = vunpack.c.h.b16 %v141
    %v436 = vunpack.c.l.b16 %v142
    %v437 = vunpack.c.h.b16 %v142
    %v438 = vunpack.c.l.b16 %v143
    %v439 = vunpack.c.h.b16 %v143
    %v440 = vunpack.c.l.b16 %v144
    %v441 = vunpack.c.h.b16 %v144
    %v442 = vunpack.c.l.b16 %v145
    %v443 = vunpack.c.h.b16 %v145
    %v444 = vunpack.c.l.b16 %v146
    %v445 = vunpack.c.h.b16 %v146
    %v446 = vunpack.c.l.b16 %v147
    %v447 = vunpack.c.h.b16 %v147
    %v448 = vunpack.c.l.b16 %v148
    %v449 = vunpack.c.h.b16 %v148
    %v450 = vunpack.c.l.b16 %v149
    %v451 = vunpack.c.h.b16 %v149
    %v452 = vunpack.c.l.b16 %v150
    %v453 = vunpack.c.h.b16 %v150
    %v454 = vunpack.c.l.b16 %v151
    %v455 = vunpack.c.h.b16 %v151
    %v456 = vunpack.c.l.b16 %v152
    %v457 = vunpack.c.h.b16 %v152
    %v458 = vunpack.c.l.b16 %v153
    %v459 = vunpack.c.h.b16 %v153
    %v460 = vpack.c.b16 %v266, %v264
    %v461 = vpack.c.b16 %v267, %v265
    %v462 = vpack.c.b16 %v270, %v268
    %v463 = vpack.c.b16 %v271, %v269
    %v464 = vpack.c.b16 %v274, %v272
    %v465 = vpack.c.b16 %v275, %v273
    %v466 = vpack.c.b16 %v278, %v276
    %v467 = vpack.c.b16 %v279, %v277
    %v468 = vpack.c.b16 %v282, %v280
    %v469 = vpack.c.b16 %v283, %v281
    %v470 = vpack.c.b16 %v286, %v284
    %v471 = vpack.c.b16 %v287, %v285
    %v472 = vpack.c.b16 %v290, %v288
    %v473 = vpack.c.b16 %v291, %v289
    %v474 = vpack.c.b16 %v294, %v292
    %v475 = vpack.c.b16 %v295, %v293
    %v476 = vpack.c.b16 %v298, %v296
    %v477 = vpack.c.b16 %v299, %v297
    %v478 = vpack.c.b16 %v302, %v300
    %v479 = vpack.c.b16 %v303, %v301
    %v480 = vpack.c.b16 %v306, %v304
    %v481 = vpack.c.b16 %v307, %v305
    %v482 = vpack.c.b16 %v310, %v308
    %v483 = vpack.c.b16 %v311, %v309
    %v484 = vpack.c.b16 %v314, %v312
    %v485 = vpack.c.b16 %v315, %v313
    %v486 = vpack.c.b16 %v318, %v316
    %v487 = vpack.c.b16 %v319, %v317
    %v488 = vpack.c.b16 %v322, %v320
    %v489 = vpack.c.b16 %v323, %v321
    %v490 = vpack.c.b16 %v326, %v324
    %v491 = vpack.c.b16 %v327, %v325
    %v492 = vpack.c.b16 %v330, %v328
    %v493 = vpack.c.b16 %v331, %v329
    %v494 = vpack.c.b16 %v334, %v332
    %v495 = vpack.c.b16 %v335, %v333
    %v496 = vpack.c.b16 %v338, %v336
    %v497 = vpack.c.b16 %v339, %v337
    %v498 = vpack.c.b16 %v342, %v340
    %v499 = vpack.c.b16 %v343, %v341
    %v500 = vpack.c.b16 %v346, %v344
    %v501 = vpack.c.b16 %v347, %v345
    %v502 = vpack.c.b16 %v350, %v348
    %v503 = vpack.c.b16 %v351, %v349
    %v504 = vpack.c.b16 %v354, %v352
    %v505 = vpack.c.b16 %v355, %v353
    %v506 = vpack.c.b16 %v358, %v356
    %v507 = vpack.c.b16 %v359, %v357
    %v508 = vpack.c.b16 %v362, %v360
    %v509 = vpack.c.b16 %v363, %v361
    %v510 = vpack.c.b16 %v366, %v364
    %v511 = vpack.c.b16 %v367, %v365
    %v512 = vpack.c.b16 %v370, %v368
    %v513 = vpack.c.b16 %v371, %v369
    %v514 = vpack.c.b16 %v374, %v372
    %v515 = vpack.c.b16 %v375, %v373
    %v516 = vpack.c.b16 %v378, %v376
    %v517 = vpack.c.b16 %v379, %v377
    %v518 = vpack.c.b16 %v382, %v380
    %v519 = vpack.c.b16 %v383, %v381
    %v520 = vpack.c.b16 %v386, %v384
    %v521 = vpack.c.b16 %v387, %v385
    %v522 = vpack.c.b16 %v390, %v388
    %v523 = vpack.c.b16 %v391, %v389
    %v524 = vpack.c.b16 %v394, %v392
    %v525 = vpack.c.b16 %v395, %v393
    %v526 = vpack.c.b16 %v398, %v396
    %v527 = vpack.c.b16 %v399, %v397
    %v528 = vpack.c.b16 %v402, %v400
    %v529 = vpack.c.b16 %v403, %v401
    %v530 = vpack.c.b16 %v406, %v404
    %v531 = vpack.c.b16 %v407, %v405
    %v532 = vpack.c.b16 %v410, %v408
    %v533 = vpack.c.b16 %v411, %v409
    %v534 = vpack.c.b16 %v414, %v412
    %v535 = vpack.c.b16 %v415, %v413
    %v536 = vpack.c.b16 %v418, %v416
    %v537 = vpack.c.b16 %v419, %v417
    %v538 = vpack.c.b16 %v422, %v420
    %v539 = vpack.c.b16 %v423, %v421
    %v540 = vpack.c.b16 %v426, %v424
    %v541 = vpack.c.b16 %v427, %v425
    %v542 = vpack.c.b16 %v430, %v428
    %v543 = vpack.c.b16 %v431, %v429
    %v544 = vpack.c.b16 %v434, %v432
    %v545 = vpack.c.b16 %v435, %v433
    %v546 = vpack.c.b16 %v438, %v436
    %v547 = vpack.c.b16 %v439, %v437
    %v548 = vpack.c.b16 %v442, %v440
    %v549 = vpack.c.b16 %v443, %v441
    %v550 = vpack.c.b16 %v446, %v444
    %v551 = vpack.c.b16 %v447, %v445
    %v552 = vpack.c.b16 %v450, %v448
    %v553 = vpack.c.b16 %v451, %v449
    %v554 = vpack.c.b16 %v454, %v452
    %v555 = vpack.c.b16 %v455, %v453
    %v556 = vpack.c.b16 %v458, %v456
    %v557 = vpack.c.b16 %v459, %v457
    %vm656 = vcmask 130048
    %v658 = vsel %vm656, %v55, 0
    %660 = vmatprep.subr.bf16.mxu0 %v475
    %661 = vmatpush1.bf16.msra.mxu0 %v474
    %662 = vmatprep.subr.bf16.mxu0 %v473
    %663 = vmatpush1.bf16.msra.mxu0 %v472
    %664 = vmatprep.subr.bf16.mxu0 %v471
    %665 = vmatpush1.bf16.msra.mxu0 %v470
    %666 = vmatprep.subr.bf16.mxu0 %v469
    %667 = vmatpush1.bf16.msra.mxu0 %v468
    %668 = vmatprep.subr.bf16.mxu0 %v467
    %669 = vmatpush1.bf16.msra.mxu0 %v466
    %670 = vmatprep.subr.bf16.mxu0 %v465
    %671 = vmatpush1.bf16.msra.mxu0 %v464
    %672 = vmatprep.subr.bf16.mxu0 %v463
    %673 = vmatpush1.bf16.msra.mxu0 %v462
    %674 = vmatprep.subr.bf16.mxu0 %v461
    %675 = vmatpush1.bf16.msra.mxu0 %v460
    %676 = vmatprep.subr.bf16.mxu0 %v491
    %677 = vmatpush2.bf16.msra.mxu0 %v490
    %678 = vmatprep.subr.bf16.mxu0 %v489
    %679 = vmatpush2.bf16.msra.mxu0 %v488
    %680 = vmatprep.subr.bf16.mxu0 %v487
    %681 = vmatpush2.bf16.msra.mxu0 %v486
    %682 = vmatprep.subr.bf16.mxu0 %v485
    %683 = vmatpush2.bf16.msra.mxu0 %v484
    %684 = vmatprep.subr.bf16.mxu0 %v483
    %685 = vmatpush2.bf16.msra.mxu0 %v482
    %686 = vmatprep.subr.bf16.mxu0 %v481
    %687 = vmatpush2.bf16.msra.mxu0 %v480
    %688 = vmatprep.subr.bf16.mxu0 %v479
    %689 = vmatpush2.bf16.msra.mxu0 %v478
    %690 = vmatprep.subr.bf16.mxu0 %v477
    %691 = vmatpush2.bf16.msra.mxu0 %v476
    %692 = vmatprep.mubr.bf16.mxu0 %v50
    %693 = vmatmul.mubr.bf16.gmra.mxu0 %v49
    %v694 = vpop.f32.mrf.mxu0
    %v695 = vadd.f32 %v159, %v694
    %v696 = vpop.f32.mrf.mxu0
    %v697 = vadd.f32 %v163, %v696
    %v698 = vpop.f32.mrf.mxu0
    %v699 = vpop.f32.mrf.mxu0
    %700 = vdwg.mxu0
    %701 = vmatprep.subr.bf16.mxu0 %v507
    %702 = vmatpush1.bf16.msra.mxu0 %v506
    %703 = vmatprep.subr.bf16.mxu0 %v505
    %704 = vmatpush1.bf16.msra.mxu0 %v504
    %705 = vmatprep.subr.bf16.mxu0 %v503
    %706 = vmatpush1.bf16.msra.mxu0 %v502
    %707 = vmatprep.subr.bf16.mxu0 %v501
    %708 = vmatpush1.bf16.msra.mxu0 %v500
    %709 = vmatprep.subr.bf16.mxu0 %v499
    %710 = vmatpush1.bf16.msra.mxu0 %v498
    %711 = vmatprep.subr.bf16.mxu0 %v497
    %712 = vmatpush1.bf16.msra.mxu0 %v496
    %713 = vmatprep.subr.bf16.mxu0 %v495
    %714 = vmatpush1.bf16.msra.mxu0 %v494
    %715 = vmatprep.subr.bf16.mxu0 %v493
    %716 = vmatpush1.bf16.msra.mxu0 %v492
    %717 = vmatprep.subr.bf16.mxu0 %v523
    %718 = vmatpush2.bf16.msra.mxu0 %v522
    %719 = vmatprep.subr.bf16.mxu0 %v521
    %720 = vmatpush2.bf16.msra.mxu0 %v520
    %721 = vmatprep.subr.bf16.mxu0 %v519
    %722 = vmatpush2.bf16.msra.mxu0 %v518
    %723 = vmatprep.subr.bf16.mxu0 %v517
    %724 = vmatpush2.bf16.msra.mxu0 %v516
    %725 = vmatprep.subr.bf16.mxu0 %v515
    %726 = vmatpush2.bf16.msra.mxu0 %v514
    %727 = vmatprep.subr.bf16.mxu0 %v513
    %728 = vmatpush2.bf16.msra.mxu0 %v512
    %729 = vmatprep.subr.bf16.mxu0 %v511
    %730 = vmatpush2.bf16.msra.mxu0 %v510
    %731 = vmatprep.subr.bf16.mxu0 %v509
    %732 = vmatpush2.bf16.msra.mxu0 %v508
    %733 = vmatprep.mubr.bf16.mxu0 %v52
    %734 = vmatmul.mubr.bf16.gmra.mxu0 %v51
    %v735 = vpop.f32.mrf.mxu0
    %v736 = vadd.f32 %v695, %v735
    %v737 = vpop.f32.mrf.mxu0
    %v738 = vadd.f32 %v697, %v737
    %v739 = vpop.f32.mrf.mxu0
    %v740 = vpop.f32.mrf.mxu0
    %741 = vdwg.mxu0
    %742 = vmatprep.subr.bf16.mxu0 %v539
    %743 = vmatpush1.bf16.msra.mxu0 %v538
    %744 = vmatprep.subr.bf16.mxu0 %v537
    %745 = vmatpush1.bf16.msra.mxu0 %v536
    %746 = vmatprep.subr.bf16.mxu0 %v535
    %747 = vmatpush1.bf16.msra.mxu0 %v534
    %748 = vmatprep.subr.bf16.mxu0 %v533
    %749 = vmatpush1.bf16.msra.mxu0 %v532
    %750 = vmatprep.subr.bf16.mxu0 %v531
    %751 = vmatpush1.bf16.msra.mxu0 %v530
    %752 = vmatprep.subr.bf16.mxu0 %v529
    %753 = vmatpush1.bf16.msra.mxu0 %v528
    %754 = vmatprep.subr.bf16.mxu0 %v527
    %755 = vmatpush1.bf16.msra.mxu0 %v526
    %756 = vmatprep.subr.bf16.mxu0 %v525
    %757 = vmatpush1.bf16.msra.mxu0 %v524
    %758 = vmatprep.subr.bf16.mxu0 %v555
    %759 = vmatpush2.bf16.msra.mxu0 %v554
    %760 = vmatprep.subr.bf16.mxu0 %v553
    %761 = vmatpush2.bf16.msra.mxu0 %v552
    %762 = vmatprep.subr.bf16.mxu0 %v551
    %763 = vmatpush2.bf16.msra.mxu0 %v550
    %764 = vmatprep.subr.bf16.mxu0 %v549
    %765 = vmatpush2.bf16.msra.mxu0 %v548
    %766 = vmatprep.subr.bf16.mxu0 %v547
    %767 = vmatpush2.bf16.msra.mxu0 %v546
    %768 = vmatprep.subr.bf16.mxu0 %v545
    %769 = vmatpush2.bf16.msra.mxu0 %v544
    %770 = vmatprep.subr.bf16.mxu0 %v543
    %771 = vmatpush2.bf16.msra.mxu0 %v542
    %772 = vmatprep.subr.bf16.mxu0 %v541
    %773 = vmatpush2.bf16.msra.mxu0 %v540
    %774 = vmatprep.mubr.bf16.mxu0 %v54
    %775 = vmatmul.mubr.bf16.gmra.mxu0 %v53
    %v776 = vpop.f32.mrf.mxu0
    %v777 = vadd.f32 %v736, %v776
    %v778 = vpop.f32.mrf.mxu0
    %v779 = vadd.f32 %v738, %v778
    %v780 = vpop.f32.mrf.mxu0
    %v781 = vpop.f32.mrf.mxu0
    %782 = vdwg.mxu0
    %783 = vmatprep.subr.bf16.mxu0 0
    %784 = vmatpush1.bf16.msra.mxu0 0
    %785 = vmatprep.subr.bf16.mxu0 0
    %786 = vmatpush1.bf16.msra.mxu0 0
    %787 = vmatprep.subr.bf16.mxu0 0
    %788 = vmatpush1.bf16.msra.mxu0 0
    %789 = vmatprep.subr.bf16.mxu0 0
    %790 = vmatpush1.bf16.msra.mxu0 0
    %791 = vmatprep.subr.bf16.mxu0 0
    %792 = vmatpush1.bf16.msra.mxu0 0
    %793 = vmatprep.subr.bf16.mxu0 0
    %794 = vmatpush1.bf16.msra.mxu0 0
    %795 = vmatprep.subr.bf16.mxu0 0
    %796 = vmatpush1.bf16.msra.mxu0 0
    %797 = vmatprep.subr.bf16.mxu0 %v557
    %798 = vmatpush1.bf16.msra.mxu0 %v556
    %799 = vmatprep.subr.bf16.mxu0 0
    %800 = vmatpush2.bf16.msra.mxu0 0
    %801 = vmatprep.subr.bf16.mxu0 0
    %802 = vmatpush2.bf16.msra.mxu0 0
    %803 = vmatprep.subr.bf16.mxu0 0
    %804 = vmatpush2.bf16.msra.mxu0 0
    %805 = vmatprep.subr.bf16.mxu0 0
    %806 = vmatpush2.bf16.msra.mxu0 0
    %807 = vmatprep.subr.bf16.mxu0 0
    %808 = vmatpush2.bf16.msra.mxu0 0
    %809 = vmatprep.subr.bf16.mxu0 0
    %810 = vmatpush2.bf16.msra.mxu0 0
    %811 = vmatprep.subr.bf16.mxu0 0
    %812 = vmatpush2.bf16.msra.mxu0 0
    %813 = vmatprep.subr.bf16.mxu0 0
    %814 = vmatpush2.bf16.msra.mxu0 0
    %815 = vmatprep.mubr.bf16.mxu0 0
    %816 = vmatmul.mubr.bf16.gmra.mxu0 %v658
    %v817 = vpop.f32.mrf.mxu0
    %v818 = vadd.f32 %v777, %v817
    %v819 = vpop.f32.mrf.mxu0
    %v820 = vadd.f32 %v779, %v819
    %v821 = vpop.f32.mrf.mxu0
    %v822 = vpop.f32.mrf.mxu0
    %823 = vdwg.mxu0
    %v824 = vpack.c.bf16 %v818, %v818
    %v825 = vpack.c.bf16 %v820, %v820
    %v826 = vmax.bf16 %v824, 0
    %v827 = vmax.bf16 %v825, 0
    %v828 = vld [vmem:[%s3] sm:$0xf]
    %v829 = vld [vmem:[%s3 + $0x4] sm:$0xf]
    %v830 = vld [vmem:[%s3 + $0x8] sm:$0xf]
    %v831 = vld [vmem:[%s3 + $0xc] sm:$0xf]
    %v832 = vld [vmem:[%s3 + $0x10] sm:$0xf]
    %v833 = vld [vmem:[%s3 + $0x14] sm:$0xf]
    %v834 = vld [vmem:[%s3 + $0x18] sm:$0xf]
    %v835 = vld [vmem:[%s3 + $0x1c] sm:$0xf]
    %v836 = vld [vmem:[%s3 + $0x20] sm:$0xf]
    %v837 = vld [vmem:[%s3 + $0x24] sm:$0xf]
    %v838 = vld [vmem:[%s3 + $0x28] sm:$0xf]
    %v839 = vld [vmem:[%s3 + $0x2c] sm:$0xf]
    %v840 = vld [vmem:[%s3 + $0x30] sm:$0xf]
    %v841 = vld [vmem:[%s3 + $0x34] sm:$0xf]
    %v842 = vld [vmem:[%s3 + $0x38] sm:$0xf]
    %v843 = vld [vmem:[%s3 + $0x3c] sm:$0xf]
    %v844 = vld [vmem:[%s3 + $0x40] sm:$0xf]
    %v845 = vld [vmem:[%s3 + $0x44] sm:$0xf]
    %v846 = vld [vmem:[%s3 + $0x48] sm:$0xf]
    %v847 = vld [vmem:[%s3 + $0x4c] sm:$0xf]
    %v848 = vld [vmem:[%s3 + $0x50] sm:$0xf]
    %v849 = vld [vmem:[%s3 + $0x54] sm:$0xf]
    %v850 = vld [vmem:[%s3 + $0x58] sm:$0xf]
    %v851 = vld [vmem:[%s3 + $0x5c] sm:$0xf]
    %v852 = vld [vmem:[%s3 + $0x60] sm:$0xf]
    %v853 = vld [vmem:[%s3 + $0x64] sm:$0xf]
    %v854 = vld [vmem:[%s3 + $0x68] sm:$0xf]
    %v855 = vld [vmem:[%s3 + $0x6c] sm:$0xf]
    %v856 = vld [vmem:[%s3 + $0x70] sm:$0xf]
    %v857 = vld [vmem:[%s3 + $0x74] sm:$0xf]
    %v858 = vld [vmem:[%s3 + $0x78] sm:$0xf]
    %v859 = vld [vmem:[%s3 + $0x7c] sm:$0xf]
    %v860 = vld [vmem:[%s4] sm:$0x1]
    %v862 = vlaneseq
    %v863 = vshrl.u32 %v862, 7
    %v864 = vsub.s32 0, %v863
    %v865 = vrot.slane %v860, %v864
    %v899 = vunpack.c.l.b16 %v828
    %v900 = vunpack.c.l.b16 %v829
    %v901 = vunpack.c.l.b16 %v830
    %v902 = vunpack.c.l.b16 %v831
    %v903 = vunpack.c.l.b16 %v832
    %v904 = vunpack.c.l.b16 %v833
    %v905 = vunpack.c.l.b16 %v834
    %v906 = vunpack.c.l.b16 %v835
    %v907 = vunpack.c.l.b16 %v836
    %v908 = vunpack.c.l.b16 %v837
    %v909 = vunpack.c.l.b16 %v838
    %v910 = vunpack.c.l.b16 %v839
    %v911 = vunpack.c.l.b16 %v840
    %v912 = vunpack.c.l.b16 %v841
    %v913 = vunpack.c.l.b16 %v842
    %v914 = vunpack.c.l.b16 %v843
    %v915 = vunpack.c.l.b16 %v844
    %v916 = vunpack.c.l.b16 %v845
    %v917 = vunpack.c.l.b16 %v846
    %v918 = vunpack.c.l.b16 %v847
    %v919 = vunpack.c.l.b16 %v848
    %v920 = vunpack.c.l.b16 %v849
    %v921 = vunpack.c.l.b16 %v850
    %v922 = vunpack.c.l.b16 %v851
    %v923 = vunpack.c.l.b16 %v852
    %v924 = vunpack.c.l.b16 %v853
    %v925 = vunpack.c.l.b16 %v854
    %v926 = vunpack.c.l.b16 %v855
    %v927 = vunpack.c.l.b16 %v856
    %v928 = vunpack.c.l.b16 %v857
    %v929 = vunpack.c.l.b16 %v858
    %v930 = vunpack.c.l.b16 %v859
    %v931 = vpack.c.b16 %v900, %v899
    %v932 = vpack.c.b16 %v902, %v901
    %v933 = vpack.c.b16 %v904, %v903
    %v934 = vpack.c.b16 %v906, %v905
    %v935 = vpack.c.b16 %v908, %v907
    %v936 = vpack.c.b16 %v910, %v909
    %v937 = vpack.c.b16 %v912, %v911
    %v938 = vpack.c.b16 %v914, %v913
    %v939 = vpack.c.b16 %v916, %v915
    %v940 = vpack.c.b16 %v918, %v917
    %v941 = vpack.c.b16 %v920, %v919
    %v942 = vpack.c.b16 %v922, %v921
    %v943 = vpack.c.b16 %v924, %v923
    %v944 = vpack.c.b16 %v926, %v925
    %v945 = vpack.c.b16 %v928, %v927
    %v946 = vpack.c.b16 %v930, %v929
    %963 = vmatprep.subr.bf16.mxu0 0
    %964 = vmatpush1.bf16.msra.mxu0 %v938
    %965 = vmatprep.subr.bf16.mxu0 0
    %966 = vmatpush1.bf16.msra.mxu0 %v937
    %967 = vmatprep.subr.bf16.mxu0 0
    %968 = vmatpush1.bf16.msra.mxu0 %v936
    %969 = vmatprep.subr.bf16.mxu0 0
    %970 = vmatpush1.bf16.msra.mxu0 %v935
    %971 = vmatprep.subr.bf16.mxu0 0
    %972 = vmatpush1.bf16.msra.mxu0 %v934
    %973 = vmatprep.subr.bf16.mxu0 0
    %974 = vmatpush1.bf16.msra.mxu0 %v933
    %975 = vmatprep.subr.bf16.mxu0 0
    %976 = vmatpush1.bf16.msra.mxu0 %v932
    %977 = vmatprep.subr.bf16.mxu0 0
    %978 = vmatpush1.bf16.msra.mxu0 %v931
    %979 = vmatprep.subr.bf16.mxu0 0
    %980 = vmatpush2.bf16.msra.mxu0 %v946
    %981 = vmatprep.subr.bf16.mxu0 0
    %982 = vmatpush2.bf16.msra.mxu0 %v945
    %983 = vmatprep.subr.bf16.mxu0 0
    %984 = vmatpush2.bf16.msra.mxu0 %v944
    %985 = vmatprep.subr.bf16.mxu0 0
    %986 = vmatpush2.bf16.msra.mxu0 %v943
    %987 = vmatprep.subr.bf16.mxu0 0
    %988 = vmatpush2.bf16.msra.mxu0 %v942
    %989 = vmatprep.subr.bf16.mxu0 0
    %990 = vmatpush2.bf16.msra.mxu0 %v941
    %991 = vmatprep.subr.bf16.mxu0 0
    %992 = vmatpush2.bf16.msra.mxu0 %v940
    %993 = vmatprep.subr.bf16.mxu0 0
    %994 = vmatpush2.bf16.msra.mxu0 %v939
    %995 = vmatprep.mubr.bf16.mxu0 %v827
    %996 = vmatmul.mubr.bf16.gmra.mxu0 %v826
    %v997 = vpop.f32.mrf.mxu0
    %v998 = vadd.f32 %v865, %v997
    %v999 = vpop.f32.mrf.mxu0
    %v1000 = vpop.f32.mrf.mxu0
    %v1001 = vpop.f32.mrf.mxu0
    %1002 = vdwg.mxu0
    %v1003 = vpack.c.bf16 %v998, %v998
    %v1004 = vmax.bf16 %v1003, 0
    %v1005 = vld [vmem:[%s5] sm:$0xf]
    %v1006 = vld [vmem:[%s5 + $0x4] sm:$0xf]
    %v1007 = vld [vmem:[%s5 + $0x8] sm:$0xf]
    %v1008 = vld [vmem:[%s5 + $0xc] sm:$0xf]
    %v1009 = vld [vmem:[%s5 + $0x10] sm:$0xf]
    %v1010 = vld [vmem:[%s5 + $0x14] sm:$0xf]
    %v1011 = vld [vmem:[%s5 + $0x18] sm:$0xf]
    %v1012 = vld [vmem:[%s5 + $0x1c] sm:$0xf]
    %v1013 = vld [vmem:[%s6] sm:$0x1]
    %v1015 = vlaneseq
    %v1016 = vshrl.u32 %v1015, 7
    %v1017 = vsub.s32 0, %v1016
    %v1018 = vrot.slane %v1013, %v1017
    %v1028 = vunpack.c.l.b16 %v1005
    %v1029 = vunpack.c.l.b16 %v1006
    %v1030 = vunpack.c.l.b16 %v1007
    %v1031 = vunpack.c.l.b16 %v1008
    %v1032 = vunpack.c.l.b16 %v1009
    %v1033 = vunpack.c.l.b16 %v1010
    %v1034 = vunpack.c.l.b16 %v1011
    %v1035 = vunpack.c.l.b16 %v1012
    %v1036 = vpack.c.b16 %v1029, %v1028
    %v1037 = vpack.c.b16 %v1031, %v1030
    %v1038 = vpack.c.b16 %v1033, %v1032
    %v1039 = vpack.c.b16 %v1035, %v1034
    %vm1044 = vcmask 523264
    %v1046 = vsel %vm1044, %v1004, 0
    %1048 = vmatprep.subr.bf16.mxu0 0
    %1049 = vmatpush1.bf16.msra.mxu0 0
    %1050 = vmatprep.subr.bf16.mxu0 0
    %1051 = vmatpush1.bf16.msra.mxu0 0
    %1052 = vmatprep.subr.bf16.mxu0 0
    %1053 = vmatpush1.bf16.msra.mxu0 0
    %1054 = vmatprep.subr.bf16.mxu0 0
    %1055 = vmatpush1.bf16.msra.mxu0 0
    %1056 = vmatprep.subr.bf16.mxu0 0
    %1057 = vmatpush1.bf16.msra.mxu0 %v1039
    %1058 = vmatprep.subr.bf16.mxu0 0
    %1059 = vmatpush1.bf16.msra.mxu0 %v1038
    %1060 = vmatprep.subr.bf16.mxu0 0
    %1061 = vmatpush1.bf16.msra.mxu0 %v1037
    %1062 = vmatprep.subr.bf16.mxu0 0
    %1063 = vmatpush1.bf16.msra.mxu0 %v1036
    %1064 = vmatprep.subr.bf16.mxu0 0
    %1065 = vmatpush2.bf16.msra.mxu0 0
    %1066 = vmatprep.subr.bf16.mxu0 0
    %1067 = vmatpush2.bf16.msra.mxu0 0
    %1068 = vmatprep.subr.bf16.mxu0 0
    %1069 = vmatpush2.bf16.msra.mxu0 0
    %1070 = vmatprep.subr.bf16.mxu0 0
    %1071 = vmatpush2.bf16.msra.mxu0 0
    %1072 = vmatprep.subr.bf16.mxu0 0
    %1073 = vmatpush2.bf16.msra.mxu0 0
    %1074 = vmatprep.subr.bf16.mxu0 0
    %1075 = vmatpush2.bf16.msra.mxu0 0
    %1076 = vmatprep.subr.bf16.mxu0 0
    %1077 = vmatpush2.bf16.msra.mxu0 0
    %1078 = vmatprep.subr.bf16.mxu0 0
    %1079 = vmatpush2.bf16.msra.mxu0 0
    %1080 = vmatprep.mubr.bf16.mxu0 0
    %1081 = vmatmul.mubr.bf16.gmra.mxu0 %v1046
    %v1082 = vpop.f32.mrf.mxu0
    %v1083 = vadd.f32 %v1018, %v1082
    %v1084 = vpop.f32.mrf.mxu0
    %v1085 = vpop.f32.mrf.mxu0
    %v1086 = vpop.f32.mrf.mxu0
    %1087 = vdwg.mxu0
    %v1088 = vmax.f32 %v1083, 0.0
    %vm1089 = vcmask 80896
    %1090 = vst.msk [vmem:[#allocation5] sm:$0xff] %vm1089, %v1088
    // Predicated region
    $region34: #{tpu_custom_call.1} parent=1 // pred_check
      _
    $region35: #{tpu_custom_call.1} parent=1 // pred_check_branch
      %1092 = sbr.rel (0) target = $region37
    $region36: #{tpu_custom_call.1} parent=1 // pred_region
      %s1094 = ssub.s32 128, 128
      %1095 = vsyncadd [#allocation4], %s1094
      %s1097 = sshll.u32 [#allocation5], 4
      %s1098 = int_to_ptr.vmem [resolvable:$true] %s1097
      %1100 = dma.vmem_to_hbm [thread:$0]  %s1098, 128, %s7, [#allocation4]
    $region37: #{tpu_custom_call.1} parent=1 // pred_fallthru
      _
    // Predicated region
    $region38: #{tpu_custom_call.1} parent=1 // pred_check
      _
    $region39: #{tpu_custom_call.1} parent=1 // pred_check_branch
      %1102 = sbr.rel (0) target = $region41
    $region40: #{tpu_custom_call.1} parent=1 // pred_region
      %1103 = dma.done [#allocation4], 128
    $region41: #{tpu_custom_call.1} parent=1 // pred_fallthru
      _
    %1104 = vsyncpa [#allocation3], 1
    %1105 = vsyncpa [#allocation4], 1

</llo_original>
